<compile_context>
chip_gen: v6e
topology: v6e:2x2x1
jax: 0.10.0
libtpu: 0.0.40
codegen_flags: <defaults>
</compile_context>

<pallas_src>
import math

import jax
import jax.numpy as jnp
from jax.experimental import pallas as pl
from jax.experimental.pallas import tpu as pltpu


# ----------------------------------------------------------------------------
# Pallas kernel: y_tile = x_tile @ W_tile, f32 accumulation on the MXU
# ----------------------------------------------------------------------------
def _linear_kernel(x_ref, w_ref, o_ref):
    # Cast x to the weight dtype on the VPU (hidden under the MXU when W is
    # bf16; a no-op for f32), accumulate in f32, store in the output dtype.
    x = x_ref[...].astype(w_ref.dtype)
    o_ref[...] = jnp.dot(
        x, w_ref[...], preferred_element_type=jnp.float32
    ).astype(o_ref.dtype)


def _vmem_budget_bytes():
    """Per-generation scoped-VMEM budget (leaves headroom for Mosaic scratch)."""
    try:
        cap = int(pltpu.get_tpu_info().vmem_capacity_bytes)
    except Exception:
        cap = 64 * 1024 * 1024  # conservative fallback: v7x physical VMEM
    return min(cap // 2, 64 * 1024 * 1024)


def irreps_linear_pallas(x, w_full, *, tile_n=1024, out_dtype=jnp.float32):
    """y = x @ w_full, with w_full the dense expansion of the e3nn Linear.

    x: (N, dim_in) float32.  w_full: (dim_in, dim_out), f32 or bf16 (prepared
    once at init by build_dense_weight).  Returns (N, dim_out) in out_dtype.
    No wrapper-side pad/cast/slice: feature dims use full-extent blocks, the
    node axis is tiled only when N exceeds the (VMEM-bounded) tile size.
    """
    n, dim_in = x.shape
    dim_in_w, dim_out = w_full.shape
    assert dim_in == dim_in_w
    if n == 0:
        return jnp.zeros((0, dim_out), out_dtype)

    x_item = jnp.dtype(x.dtype).itemsize
    w_item = jnp.dtype(w_full.dtype).itemsize
    o_item = jnp.dtype(out_dtype).itemsize

    budget = _vmem_budget_bytes()
    # VMEM use: resident W (Pallas double-buffers it even with a constant
    # index_map, so count 2x) + double-buffered x / out node tiles.
    w_resident = 2 * dim_in * dim_out * w_item
    per_row = 2 * (dim_in * x_item + dim_out * o_item)
    avail = budget - w_resident
    if avail < 8 * per_row:
        # TODO(synk): add a K-/dim_out-tiled accumulator path instead of
        # keeping all of W resident once irrep multiplicities get this large.
        raise NotImplementedError(
            "w_full too large to keep resident in VMEM for this tiling")
    max_tile = max(8, (avail // per_row) // 8 * 8)
    tile_n_eff = max(8, min(tile_n, max_tile))

    if n <= tile_n_eff:
        tile_rows, grid_n = n, 1          # single full-extent block, no padding
    else:
        tile_rows = tile_n_eff
        grid_n = pl.cdiv(n, tile_rows)
        # Ragged tail (N not a multiple of tile_rows) is handled by Pallas's
        # boundary behavior: rows are independent, out-of-range output rows
        # are not written back, so valid outputs are exact.

    # Optional split of the output width so a second TensorCore (v7x) gets
    # work when the node grid collapses to a single block.  Only when dim_out
    # splits into 128-lane multiples; costs one extra ~0.35us step elsewhere.
    tile_out = dim_out
    if grid_n == 1 and dim_out >= 256 and dim_out % 256 == 0:
        tile_out = dim_out // 2
    grid_o = dim_out // tile_out

    cost = pl.CostEstimate(
        flops=2 * n * dim_in * dim_out,
        transcendentals=0,
        bytes_accessed=(n * dim_in * x_item
                        + dim_in * dim_out * w_item
                        + n * dim_out * o_item),
    )

    return pl.pallas_call(
        _linear_kernel,
        out_shape=jax.ShapeDtypeStruct((n, dim_out), out_dtype),
        grid=(grid_n, grid_o),
        in_specs=[
            pl.BlockSpec((tile_rows, dim_in), lambda i, j: (i, 0)),
            # W is small and constant across the node axis; the constant
            # index_map keeps it resident (no re-fetch once loaded).
            pl.BlockSpec((dim_in, tile_out), lambda i, j: (0, j)),
        ],
        out_specs=pl.BlockSpec((tile_rows, tile_out), lambda i, j: (i, j)),
        compiler_params=pltpu.CompilerParams(
            dimension_semantics=("parallel", "parallel"),
            vmem_limit_bytes=budget,
        ),
        cost_estimate=cost,
    )(x, w_full)


# ----------------------------------------------------------------------------
# Parameter setup (plain JAX, one-time): per-irrep weights -> dense W
# ----------------------------------------------------------------------------
def init_irreps_linear_weights(key, irreps):
    """irreps: list of (mul_in, mul_out, l).  e3nn init: N(0, 1) per path."""
    weights = []
    for (mul_in, mul_out, _l) in irreps:
        key, sub = jax.random.split(key)
        weights.append(jax.random.normal(sub, (mul_in, mul_out), jnp.float32))
    return weights


def build_dense_weight(irreps, weights, compute_dtype=jnp.float32):
    """One-time parameter setup (hoisted out of the forward pass): expand
    per-irrep (mul_in, mul_out) weights into a dense (dim_in, dim_out) matrix,
    including e3nn path normalization 1/sqrt(fan_in) (single path per output
    irrep here, so fan_in = mul_in).  Optionally cast to bf16 here, once."""
    dim_in = sum(mi * (2 * l + 1) for (mi, _mo, l) in irreps)
    dim_out = sum(mo * (2 * l + 1) for (_mi, mo, l) in irreps)
    w_full = jnp.zeros((dim_in, dim_out), jnp.float32)
    oin, oout = 0, 0
    for (mi, mo, l), w in zip(irreps, weights):
        d = 2 * l + 1
        alpha = 1.0 / math.sqrt(mi)
        # (mi, mo) -> (mi, d, mo, d) with identity over the m-components.
        block = jnp.einsum("uw,ij->uiwj", alpha * w, jnp.eye(d, dtype=jnp.float32))
        block = block.reshape(mi * d, mo * d)
        w_full = w_full.at[oin:oin + mi * d, oout:oout + mo * d].set(block)
        oin += mi * d
        oout += mo * d
    return w_full.astype(compute_dtype)


def irreps_linear_reference(x, irreps, weights):
    """Pure-JAX f32 reference of the e3nn Linear forward (for verification)."""
    outs = []
    oin = 0
    for (mi, mo, l), w in zip(irreps, weights):
        d = 2 * l + 1
        alpha = 1.0 / math.sqrt(mi)
        xs = x[:, oin:oin + mi * d].reshape(-1, mi, d)
        ys = alpha * jnp.einsum("uw,nud->nwd", w, xs)
        outs.append(ys.reshape(-1, mo * d))
        oin += mi * d
    return jnp.concatenate(outs, axis=-1)


# ----------------------------------------------------------------------------
if __name__ == "__main__":
    # irreps_in  = "8x0e + 8x1o + 8x2e"    -> dim_in  = 8 + 24 + 40 = 72
    # irreps_out = "16x0e + 16x1o + 16x2e" -> dim_out = 16 + 48 + 80 = 144
    irreps = [(8, 16, 0), (8, 16, 1), (8, 16, 2)]
    dim_in = sum(mi * (2 * l + 1) for (mi, _mo, l) in irreps)
    dim_out = sum(mo * (2 * l + 1) for (_mi, mo, l) in irreps)
    num_nodes = 16  # data[key_input]: node features of the atom graph

    key = jax.random.PRNGKey(0)
    key_x, key_w, key_x2 = jax.random.split(key, 3)
    x = jax.random.normal(key_x, (num_nodes, dim_in), jnp.float32)

    weights = init_irreps_linear_weights(key_w, irreps)
    w_full = build_dense_weight(irreps, weights)  # one-time setup, f32

    # Emulate: data[self.key_output] = self.linear(data[self.key_input])
    data = {"node_feature": x}
    y = irreps_linear_pallas(data["node_feature"], w_full)
    data["node_feature_out"] = y
    jax.block_until_ready(y)

    y_ref = irreps_linear_reference(x, irreps, weights)
    assert y.shape == (num_nodes, dim_out)
    # f32 storage; tolerance allows for generation-dependent MXU f32 pass count.
    assert jnp.allclose(y, y_ref, atol=2e-2, rtol=2e-2), "mismatch vs reference"

    # Also exercise the node-tiled (multi-block, resident-W) path with a
    # larger graph and a forced small tile.
    n2 = 384
    x2 = jax.random.normal(key_x2, (n2, dim_in), jnp.float32)
    y2 = irreps_linear_pallas(x2, w_full, tile_n=128)
    jax.block_until_ready(y2)
    y2_ref = irreps_linear_reference(x2, irreps, weights)
    assert y2.shape == (n2, dim_out)
    assert jnp.allclose(y2, y2_ref, atol=2e-2, rtol=2e-2), "mismatch (tiled path)"

    print("KERNEL_OK")
</pallas_src>

<mosaic_0001>
module attributes {stable_mosaic.version = 11 : i64} {
  func.func @_linear_kernel(%arg0: i32, %arg1: i32, %arg2: memref<16x72xf32, #tpu.memory_space<vmem>>, %arg3: memref<72x144xf32, #tpu.memory_space<vmem>>, %arg4: memref<16x144xf32, #tpu.memory_space<vmem>>) attributes {dimension_semantics = [#tpu.dimension_semantics<parallel>, #tpu.dimension_semantics<parallel>], iteration_bounds = array<i64: 1, 1>, scalar_prefetch = 0 : i64, scratch_operands = 0 : i64, tpu.core_type = #tpu.core_type<tc>, window_params = [{transform_indices = @transform_0, window_bounds = array<i64: 16, 72>}, {transform_indices = @transform_1, window_bounds = array<i64: 72, 144>}, {transform_indices = @transform_2, window_bounds = array<i64: 16, 144>}]} {
    %c0 = arith.constant 0 : index
    %c0_0 = arith.constant 0 : index
    %0 = vector.load %arg2[%c0, %c0_0] : memref<16x72xf32, #tpu.memory_space<vmem>>, vector<16x72xf32>
    %c0_1 = arith.constant 0 : index
    %c0_2 = arith.constant 0 : index
    %1 = vector.load %arg3[%c0_1, %c0_2] : memref<72x144xf32, #tpu.memory_space<vmem>>, vector<72x144xf32>
    %cst = arith.constant dense<0.000000e+00> : vector<16x144xf32>
    %2 = tpu.matmul %0, %1, %cst {dimension_numbers = #tpu.dot_dimension_numbers<[1], [0], [0], [1], [0, 0, 1, 1], [], []>} : vector<16x72xf32>, vector<72x144xf32>, vector<16x144xf32> -> vector<16x144xf32>
    %c0_3 = arith.constant 0 : index
    %c0_4 = arith.constant 0 : index
    %3 = vector.load %arg4[%c0_3, %c0_4] : memref<16x144xf32, #tpu.memory_space<vmem>>, vector<16x144xf32>
    tpu.vector_store %arg4[%c0_3, %c0_4], %2 {strides = array<i32>} : memref<16x144xf32, #tpu.memory_space<vmem>>, vector<16x144xf32>,
    return
  }
  func.func @transform_0(%arg0: i32, %arg1: i32) -> (i32, i32) {
    %c0_i32 = arith.constant 0 : i32
    %c0_i32_0 = arith.constant 0 : i32
    return %arg0, %c0_i32 : i32, i32
  }
  func.func @transform_1(%arg0: i32, %arg1: i32) -> (i32, i32) {
    %c0_i32 = arith.constant 0 : i32
    %c0_i32_0 = arith.constant 0 : i32
    return %c0_i32, %arg1 : i32, i32
  }
  func.func @transform_2(%arg0: i32, %arg1: i32) -> (i32, i32) {
    %c0_i32 = arith.constant 0 : i32
    return %arg0, %arg1 : i32, i32
  }
}

</mosaic_0001>

<llo_original>
// kernel: tpu_custom_call.1
$region0: #{tpu_custom_call.1}
  #allocation0 [shape = 'u32[]', space=smem, size = 0x4, offset = 0x4, fixed_abs, tag = 'smem constant byte address 0x4 - core index']
  #allocation1 [shape = 'u32[144,128]{1,0:T(1,128)}', space=vmem, size = 0x12000, scoped, tag = 'internal scratch']
  %s0 = inlined_call_operand.hbm [shape: f32[16,72], index: 0, kind: input, shape index: {}]
  %s1 = inlined_call_operand.hbm [shape: f32[72,144], index: 1, kind: input, shape index: {}]
  %s2 = inlined_call_operand.hbm [shape: f32[16,144], index: 2, kind: output, shape index: {}]
  %s3 = sld [smem:[#allocation0]]
  $region26: #{tpu_custom_call.1} parent=0
    _
  %s5 = ssub.s32 1, %s3
  %s6 = scalar_select 0, %s5, %s3
  $region1: #{tpu_custom_call.1} parent=0
    #allocation2 [shape = 'u8[8192]{0}', space=vmem, size = 0x2000, scoped, tag = 'input window, operand 0, single buffered']
    #allocation3 [shape = 's32[1]{0}', space=sflag, size = 0x4, scoped, tag = 'scoped memory for tpu_custom_call.1']
    #allocation4 [shape = 's32[1]{0}', space=sflag, size = 0x4, scoped, tag = 'scoped memory for tpu_custom_call.1']
    #allocation5 [shape = 'u8[73728]{0}', space=vmem, size = 0x12000, scoped, tag = 'input window, operand 1, single buffered']
    #allocation6 [shape = 's32[1]{0}', space=sflag, size = 0x4, scoped, tag = 'scoped memory for tpu_custom_call.1']
    #allocation7 [shape = 'u8[16384]{0}', space=vmem, size = 0x4000, scoped, tag = 'output window, operand 0, single buffered']
    %7 = vsyncpa [#allocation3], 0
    %8 = vsyncpa [#allocation6], 0
    %9 = vsyncpa [#allocation4], 0
    // Predicated region
    $region2: #{tpu_custom_call.1} parent=1 // pred_check
      _
    $region3: #{tpu_custom_call.1} parent=1 // pred_check_branch
      %11 = sbr.rel (0) target = $region5
    $region4: #{tpu_custom_call.1} parent=1 // pred_region
      %s13 = ssub.s32 256, 256
      %14 = vsyncadd [#allocation3], %s13
      %s15 = sshll.u32 [#allocation2], 4
      %s16 = int_to_ptr.vmem [resolvable:$true] %s15
      %21 = dma.hbm_to_vmem [thread:$0]  %s0, 256, %s16, [#allocation3], 128, 128, 8
    $region5: #{tpu_custom_call.1} parent=1 // pred_fallthru
      _
    // Predicated region
    $region6: #{tpu_custom_call.1} parent=1 // pred_check
      _
    $region7: #{tpu_custom_call.1} parent=1 // pred_check_branch
      %23 = sbr.rel (0) target = $region9
    $region8: #{tpu_custom_call.1} parent=1 // pred_region
      %s25 = ssub.s32 2304, 2304
      %26 = vsyncadd [#allocation6], %s25
      %s27 = sshll.u32 [#allocation5], 4
      %s28 = int_to_ptr.vmem [resolvable:$true] %s27
      %33 = dma.hbm_to_vmem [thread:$0]  %s1, 2304, %s28, [#allocation6], 256, 256, 16
    $region9: #{tpu_custom_call.1} parent=1 // pred_fallthru
      _
    // Predicated region
    $region10: #{tpu_custom_call.1} parent=1 // pred_check
      _
    $region11: #{tpu_custom_call.1} parent=1 // pred_check_branch
      %35 = sbr.rel (0) target = $region13
    $region12: #{tpu_custom_call.1} parent=1 // pred_region
      %36 = dma.done [#allocation3], 256
    $region13: #{tpu_custom_call.1} parent=1 // pred_fallthru
      _
    // Predicated region
    $region14: #{tpu_custom_call.1} parent=1 // pred_check
      _
    $region15: #{tpu_custom_call.1} parent=1 // pred_check_branch
      %38 = sbr.rel (0) target = $region17
    $region16: #{tpu_custom_call.1} parent=1 // pred_region
      %39 = dma.done [#allocation6], 2304
    $region17: #{tpu_custom_call.1} parent=1 // pred_fallthru
      _
    %v40 = vld [vmem:[#allocation2] sm:$0xff]
    %v41 = vld [vmem:[#allocation2 + $0x8] sm:$0xff]
    %v42 = vld [vmem:[#allocation5] sm:$0xff]
    %v43 = vld [vmem:[#allocation5 + $0x8] sm:$0xff]
    %v44 = vld [vmem:[#allocation5 + $0x10] sm:$0xff]
    %v45 = vld [vmem:[#allocation5 + $0x18] sm:$0xff]
    %v46 = vld [vmem:[#allocation5 + $0x20] sm:$0xff]
    %v47 = vld [vmem:[#allocation5 + $0x28] sm:$0xff]
    %v48 = vld [vmem:[#allocation5 + $0x30] sm:$0xff]
    %v49 = vld [vmem:[#allocation5 + $0x38] sm:$0xff]
    %v50 = vld [vmem:[#allocation5 + $0x40] sm:$0xff]
    %v51 = vld [vmem:[#allocation5 + $0x48] sm:$0xff]
    %v52 = vld [vmem:[#allocation5 + $0x50] sm:$0xff]
    %v53 = vld [vmem:[#allocation5 + $0x58] sm:$0xff]
    %v54 = vld [vmem:[#allocation5 + $0x60] sm:$0xff]
    %v55 = vld [vmem:[#allocation5 + $0x68] sm:$0xff]
    %v56 = vld [vmem:[#allocation5 + $0x70] sm:$0xff]
    %v57 = vld [vmem:[#allocation5 + $0x78] sm:$0xff]
    %v58 = vld [vmem:[#allocation5 + $0x80] sm:$0xff]
    %v59 = vld [vmem:[#allocation5 + $0x88] sm:$0xff]
    %vm60 = vcmask 588800
    %v62 = vsel %vm60, %v40, 0
    %v65 = vsel %vm60, %v41, 0
    %67 = vmatprep.subr.mxu0 0.0
    %68 = vmatpush1.msra.mxu0 0.0
    %69 = vmatprep.subr.mxu0 0.0
    %70 = vmatpush1.msra.mxu0 0.0
    %71 = vmatprep.subr.mxu0 0.0
    %72 = vmatpush1.msra.mxu0 0.0
    %73 = vmatprep.subr.mxu0 0.0
    %74 = vmatpush1.msra.mxu0 0.0
    %75 = vmatprep.subr.mxu0 0.0
    %76 = vmatpush1.msra.mxu0 0.0
    %77 = vmatprep.subr.mxu0 0.0
    %78 = vmatpush1.msra.mxu0 0.0
    %79 = vmatprep.subr.mxu0 0.0
    %80 = vmatpush1.msra.mxu0 0.0
    %81 = vmatprep.subr.mxu0 %v59
    %82 = vmatpush1.msra.mxu0 %v58
    %83 = vmatprep.subr.mxu0 %v57
    %84 = vmatpush1.msra.mxu0 %v56
    %85 = vmatprep.subr.mxu0 %v55
    %86 = vmatpush1.msra.mxu0 %v54
    %87 = vmatprep.subr.mxu0 %v53
    %88 = vmatpush1.msra.mxu0 %v52
    %89 = vmatprep.subr.mxu0 %v51
    %90 = vmatpush1.msra.mxu0 %v50
    %91 = vmatprep.subr.mxu0 %v49
    %92 = vmatpush1.msra.mxu0 %v48
    %93 = vmatprep.subr.mxu0 %v47
    %94 = vmatpush1.msra.mxu0 %v46
    %95 = vmatprep.subr.mxu0 %v45
    %96 = vmatpush1.msra.mxu0 %v44
    %97 = vmatprep.subr.mxu0 %v43
    %98 = vmatpush1.msra.mxu0 %v42
    %99 = vmatprep.subr.mxu0 0.0
    %100 = vmatpush2.msra.mxu0 0.0
    %101 = vmatprep.subr.mxu0 0.0
    %102 = vmatpush2.msra.mxu0 0.0
    %103 = vmatprep.subr.mxu0 0.0
    %104 = vmatpush2.msra.mxu0 0.0
    %105 = vmatprep.subr.mxu0 0.0
    %106 = vmatpush2.msra.mxu0 0.0
    %107 = vmatprep.subr.mxu0 0.0
    %108 = vmatpush2.msra.mxu0 0.0
    %109 = vmatprep.subr.mxu0 0.0
    %110 = vmatpush2.msra.mxu0 0.0
    %111 = vmatprep.subr.mxu0 0.0
    %112 = vmatpush2.msra.mxu0 0.0
    %113 = vmatprep.subr.mxu0 0.0
    %114 = vmatpush2.msra.mxu0 0.0
    %115 = vmatprep.subr.mxu0 0.0
    %116 = vmatpush2.msra.mxu0 0.0
    %117 = vmatprep.subr.mxu0 0.0
    %118 = vmatpush2.msra.mxu0 0.0
    %119 = vmatprep.subr.mxu0 0.0
    %120 = vmatpush2.msra.mxu0 0.0
    %121 = vmatprep.subr.mxu0 0.0
    %122 = vmatpush2.msra.mxu0 0.0
    %123 = vmatprep.subr.mxu0 0.0
    %124 = vmatpush2.msra.mxu0 0.0
    %125 = vmatprep.subr.mxu0 0.0
    %126 = vmatpush2.msra.mxu0 0.0
    %127 = vmatprep.subr.mxu0 0.0
    %128 = vmatpush2.msra.mxu0 0.0
    %129 = vmatprep.subr.mxu0 0.0
    %130 = vmatpush2.msra.mxu0 0.0
    %131 = vmatprep.mubr.f32.mxu0 0.0
    %132 = vmatmul.mubr.f32.gmra.mxu0 %v62
    %v133 = vpop.f32.mrf.mxu0
    %v134 = vadd.f32 0.0, %v133
    %v135 = vpop.f32.mrf.mxu0
    %v136 = vadd.f32 0.0, %v135
    %137 = vmatprep.mubr.f32.mxu0 0.0
    %138 = vmatmul.mubr.f32.gmra.mxu0 %v65
    %v139 = vpop.f32.mrf.mxu0
    %v140 = vadd.f32 0.0, %v139
    %v141 = vpop.f32.mrf.mxu0
    %v142 = vadd.f32 0.0, %v141
    %143 = vdwg.mxu0
    %144 = vst [vmem:[#allocation7] sm:$0xff] %v134
    %vm145 = vcmask 130048
    %146 = vst.msk [vmem:[#allocation7 + $0x8] sm:$0xff] %vm145, %v136
    %147 = vst [vmem:[#allocation7 + $0x10] sm:$0xff] %v140
    %148 = vst.msk [vmem:[#allocation7 + $0x18] sm:$0xff] %vm145, %v142
    // Predicated region
    $region18: #{tpu_custom_call.1} parent=1 // pred_check
      _
    $region19: #{tpu_custom_call.1} parent=1 // pred_check_branch
      %150 = sbr.rel (0) target = $region21
    $region20: #{tpu_custom_call.1} parent=1 // pred_region
      %s152 = ssub.s32 512, 512
      %153 = vsyncadd [#allocation4], %s152
      %s154 = sshll.u32 [#allocation7], 4
      %s155 = int_to_ptr.vmem [resolvable:$true] %s154
      %160 = dma.vmem_to_hbm [thread:$0]  %s155, 512, %s2, [#allocation4], 256, 256, 16
    $region21: #{tpu_custom_call.1} parent=1 // pred_fallthru
      _
    // Predicated region
    $region22: #{tpu_custom_call.1} parent=1 // pred_check
      _
    $region23: #{tpu_custom_call.1} parent=1 // pred_check_branch
      %162 = sbr.rel (0) target = $region25
    $region24: #{tpu_custom_call.1} parent=1 // pred_region
      %163 = dma.done [#allocation4], 512
    $region25: #{tpu_custom_call.1} parent=1 // pred_fallthru
      _
    %164 = vsyncpa [#allocation3], 1
    %165 = vsyncpa [#allocation6], 1
    %166 = vsyncpa [#allocation4], 1

</llo_original>
